<compile_context>
chip_gen: v6e
topology: v6e:2x2x1
jax: 0.10.0
libtpu: 0.0.40
codegen_flags: <defaults>
</compile_context>

<pallas_src>
import jax
import jax.numpy as jnp
from jax.experimental import pallas as pl
from jax.experimental.pallas import tpu as pltpu


def _act16_kernel(x_ref, w_ref, e_ref, b_ref, o_ref):
    """x_ref / o_ref: (3, TILE_ROWS, 128) blocks (channel, row, lane).

    w_ref: (3,3) f32 SMEM  = conv_weight / div_const        (per out channel)
    e_ref: (3,)  f32 SMEM  = add_const - sub_const
    b_ref: (3,)  f32 SMEM  = bias/div - (W/div) @ (sub*add)
    Every per-channel operand is a dense (TILE_ROWS, 128) tile -> full vreg
    occupancy and unmasked lane-dense stores.
    """
    z = []
    for c in range(3):
        xc = x_ref[c].astype(jnp.float32)          # (TILE_ROWS, 128)
        xx = xc * xc                               # torch.mul(x, x)
        z.append(xx * (xx + e_ref[c]))             # (xx - s)(xx + a) + s*a term folded away
    for o in range(3):
        acc = z[0] * w_ref[o, 0]
        acc = acc + z[1] * w_ref[o, 1]
        acc = acc + z[2] * w_ref[o, 2]
        acc = acc + b_ref[o]
        o_ref[o] = acc.astype(o_ref.dtype)


def _pick_tile_rows(n, rows, sublane_align, max_tile_rows=1024, min_steps=4):
    """Large row tiles (~1-2 MiB blocks), but keep >= min_steps grid steps so
    v7x's two TensorCores (and the DMA pipeline) have work. A tile smaller
    than the full row axis is kept a multiple of the sublane alignment."""
    tile = rows if rows <= max_tile_rows else max_tile_rows

    def n_steps(t):
        return n * ((rows + t - 1) // t)

    while n_steps(tile) < min_steps:
        half = (tile // 2) // sublane_align * sublane_align
        if half < sublane_align:
            break
        tile = half
    return tile


def activation16bit_forward(x_nchw, weight_oihw, bias, add_const, sub_const,
                            div_const, *, max_tile_rows=1024):
    """x_nchw: (N, 3, H, W). Returns (N, 3, H, W) in x_nchw.dtype."""
    N, C, H, W = x_nchw.shape
    assert C == 3, "Activation16BitNet uses Conv2d(3, 3, 1)"
    HW = H * W
    io_dtype = x_nchw.dtype

    # ---- exact constant folding (tiny arrays, done once in the wrapper) ----
    d = div_const.reshape(C).astype(jnp.float32)                      # (3,)
    w = weight_oihw.reshape(C, C).astype(jnp.float32) / d[:, None]    # W / div
    b = bias.astype(jnp.float32) / d                                  # b / div
    a = add_const.reshape(C).astype(jnp.float32)
    s = sub_const.reshape(C).astype(jnp.float32)
    e = a - s                               # (xx - s)(xx + a) = xx(xx + e) - s*a
    b2 = b - w @ (s * a)                    # fold the -s*a contribution into bias

    # ---- layout: (N, 3, rows, 128): pixels as dense (rows, 128) tiles ------
    if HW % 128 != 0:
        # TODO(synk): rare lane-misaligned shapes take one pad/slice round-trip;
        # could instead mask the tail inside the kernel.
        pad = 128 - HW % 128
        x_flat = jnp.pad(x_nchw.reshape(N, C, HW), ((0, 0), (0, 0), (0, pad)))
        hw_p = HW + pad
    else:
        x_flat = x_nchw.reshape(N, C, HW)   # pure view, no copy
        hw_p = HW
    rows = hw_p // 128
    x4 = x_flat.reshape(N, C, rows, 128)

    sublane = {4: 8, 2: 16, 1: 32}.get(jnp.dtype(io_dtype).itemsize, 8)
    tile_rows = _pick_tile_rows(N, rows, sublane, max_tile_rows=max_tile_rows)
    num_tiles = pl.cdiv(rows, tile_rows)    # ragged last block: OOB writes dropped

    out4 = pl.pallas_call(
        _act16_kernel,
        out_shape=jax.ShapeDtypeStruct((N, C, rows, 128), io_dtype),
        grid_spec=pltpu.PrefetchScalarGridSpec(
            num_scalar_prefetch=0,
            grid=(N, num_tiles),
            in_specs=[
                pl.BlockSpec((None, C, tile_rows, 128),
                             lambda n, t: (n, 0, t, 0)),
                pl.BlockSpec(memory_space=pltpu.MemorySpace.SMEM),  # w'
                pl.BlockSpec(memory_space=pltpu.MemorySpace.SMEM),  # e = a - s
                pl.BlockSpec(memory_space=pltpu.MemorySpace.SMEM),  # b''
            ],
            out_specs=pl.BlockSpec((None, C, tile_rows, 128),
                                   lambda n, t: (n, 0, t, 0)),
        ),
        compiler_params=pltpu.CompilerParams(
            dimension_semantics=("parallel", "parallel"),
            vmem_limit_bytes=32 * 1024 * 1024),
    )(x4, w, e, b2)

    out = out4.reshape(N, C, hw_p)
    if hw_p != HW:
        out = out[:, :, :HW]
    return out.reshape(N, C, H, W)


def _reference(x, w, b, addc, subc, divc):
    """Pure-JAX reference mirroring the PyTorch forward (NCHW)."""
    xx = x * x
    y = (xx - subc[None]) * (xx + addc[None])
    conv = jnp.einsum('nchw,oc->nohw', y, w.reshape(3, 3)) + b[None, :, None, None]
    return conv / divc[None]


if __name__ == "__main__":
    key = jax.random.PRNGKey(0)
    k_x, k_w, k_b, k_add, k_sub = jax.random.split(key, 5)

    N, C, H, W = 2, 3, 16, 16     # H*W = 256 -> 2 dense (rows,128) tiles/channel
    x = jax.random.normal(k_x, (N, C, H, W), dtype=jnp.float32)

    # Deterministic "Conv2d(3, 3, 1)" parameters and module buffers.
    weight = jax.random.normal(k_w, (C, C, 1, 1), dtype=jnp.float32) * 0.1
    bias = jax.random.normal(k_b, (C,), dtype=jnp.float32) * 0.1
    add_const = jax.random.uniform(k_add, (C, 1, 1), dtype=jnp.float32)
    sub_const = jax.random.uniform(k_sub, (C, 1, 1), dtype=jnp.float32)
    div_const = 2.0 * jnp.ones((C, 1, 1), dtype=jnp.float32)

    # f32 path: exact check against the reference.
    out = activation16bit_forward(x, weight, bias, add_const, sub_const,
                                  div_const)
    out = jax.block_until_ready(out)
    ref = _reference(x, weight, bias, add_const, sub_const, div_const)
    assert out.shape == (N, C, H, W)
    assert jnp.allclose(out, ref, atol=1e-4, rtol=1e-5), "f32 mismatch vs reference"

    # bf16 streaming path (halves HBM bytes on a memory-bound op); compute is
    # still f32 inside the kernel, so only output rounding differs.
    x16 = x.astype(jnp.bfloat16)
    out16 = jax.block_until_ready(
        activation16bit_forward(x16, weight, bias, add_const, sub_const,
                                div_const))
    ref16 = _reference(x16.astype(jnp.float32), weight, bias, add_const,
                       sub_const, div_const)
    assert out16.dtype == jnp.bfloat16
    assert jnp.allclose(out16.astype(jnp.float32), ref16, atol=0.15, rtol=0.05), \
        "bf16 mismatch vs reference"

    print("KERNEL_OK")
</pallas_src>

<mosaic_0001>
module attributes {stable_mosaic.version = 11 : i64} {
  func.func @_act16_kernel(%arg0: i32, %arg1: i32, %arg2: memref<1x3x2x128xf32, #tpu.memory_space<vmem>>, %arg3: memref<3x3xf32, #tpu.memory_space<smem>>, %arg4: memref<3xf32, #tpu.memory_space<smem>>, %arg5: memref<3xf32, #tpu.memory_space<smem>>, %arg6: memref<1x3x2x128xf32, #tpu.memory_space<vmem>>) attributes {dimension_semantics = [#tpu.dimension_semantics<parallel>, #tpu.dimension_semantics<parallel>], iteration_bounds = array<i64: 2, 1>, scalar_prefetch = 0 : i64, scratch_operands = 0 : i64, tpu.core_type = #tpu.core_type<tc>, window_params = [{transform_indices = @transform_0, window_bounds = array<i64: 1, 3, 2, 128>}, {transform_indices = @transform_1, window_bounds = array<i64: 3, 3>}, {transform_indices = @transform_2, window_bounds = array<i64: 3>}, {transform_indices = @transform_3, window_bounds = array<i64: 3>}, {transform_indices = @transform_4, window_bounds = array<i64: 1, 3, 2, 128>}]} {
    %c0 = arith.constant 0 : index
    %c0_0 = arith.constant 0 : index
    %c0_1 = arith.constant 0 : index
    %c0_2 = arith.constant 0 : index
    %0 = vector.load %arg2[%c0, %c0_0, %c0_1, %c0_2] : memref<1x3x2x128xf32, #tpu.memory_space<vmem>>, vector<1x1x2x128xf32>
    %1 = vector.shape_cast %0 : vector<1x1x2x128xf32> to vector<2x128xf32>
    %2 = arith.mulf %1, %1 : vector<2x128xf32>
    %c0_3 = arith.constant 0 : index
    %3 = memref.load %arg4[%c0_3] : memref<3xf32, #tpu.memory_space<smem>>
    %4 = vector.broadcast %3 : f32 to vector<2x128xf32>
    %5 = arith.addf %2, %4 : vector<2x128xf32>
    %6 = arith.mulf %2, %5 : vector<2x128xf32>
    %c0_4 = arith.constant 0 : index
    %c1 = arith.constant 1 : index
    %c0_5 = arith.constant 0 : index
    %c0_6 = arith.constant 0 : index
    %7 = vector.load %arg2[%c0_4, %c1, %c0_5, %c0_6] : memref<1x3x2x128xf32, #tpu.memory_space<vmem>>, vector<1x1x2x128xf32>
    %8 = vector.shape_cast %7 : vector<1x1x2x128xf32> to vector<2x128xf32>
    %9 = arith.mulf %8, %8 : vector<2x128xf32>
    %c1_7 = arith.constant 1 : index
    %10 = memref.load %arg4[%c1_7] : memref<3xf32, #tpu.memory_space<smem>>
    %11 = vector.broadcast %10 : f32 to vector<2x128xf32>
    %12 = arith.addf %9, %11 : vector<2x128xf32>
    %13 = arith.mulf %9, %12 : vector<2x128xf32>
    %c0_8 = arith.constant 0 : index
    %c2 = arith.constant 2 : index
    %c0_9 = arith.constant 0 : index
    %c0_10 = arith.constant 0 : index
    %14 = vector.load %arg2[%c0_8, %c2, %c0_9, %c0_10] : memref<1x3x2x128xf32, #tpu.memory_space<vmem>>, vector<1x1x2x128xf32>
    %15 = vector.shape_cast %14 : vector<1x1x2x128xf32> to vector<2x128xf32>
    %16 = arith.mulf %15, %15 : vector<2x128xf32>
    %c2_11 = arith.constant 2 : index
    %17 = memref.load %arg4[%c2_11] : memref<3xf32, #tpu.memory_space<smem>>
    %18 = vector.broadcast %17 : f32 to vector<2x128xf32>
    %19 = arith.addf %16, %18 : vector<2x128xf32>
    %20 = arith.mulf %16, %19 : vector<2x128xf32>
    %c0_12 = arith.constant 0 : index
    %c0_13 = arith.constant 0 : index
    %21 = memref.load %arg3[%c0_12, %c0_13] : memref<3x3xf32, #tpu.memory_space<smem>>
    %22 = vector.broadcast %21 : f32 to vector<2x128xf32>
    %23 = arith.mulf %6, %22 : vector<2x128xf32>
    %c0_14 = arith.constant 0 : index
    %c1_15 = arith.constant 1 : index
    %24 = memref.load %arg3[%c0_14, %c1_15] : memref<3x3xf32, #tpu.memory_space<smem>>
    %25 = vector.broadcast %24 : f32 to vector<2x128xf32>
    %26 = arith.mulf %13, %25 : vector<2x128xf32>
    %27 = arith.addf %23, %26 : vector<2x128xf32>
    %c0_16 = arith.constant 0 : index
    %c2_17 = arith.constant 2 : index
    %28 = memref.load %arg3[%c0_16, %c2_17] : memref<3x3xf32, #tpu.memory_space<smem>>
    %29 = vector.broadcast %28 : f32 to vector<2x128xf32>
    %30 = arith.mulf %20, %29 : vector<2x128xf32>
    %31 = arith.addf %27, %30 : vector<2x128xf32>
    %c0_18 = arith.constant 0 : index
    %32 = memref.load %arg5[%c0_18] : memref<3xf32, #tpu.memory_space<smem>>
    %33 = vector.broadcast %32 : f32 to vector<2x128xf32>
    %34 = arith.addf %31, %33 : vector<2x128xf32>
    %c0_19 = arith.constant 0 : index
    %c0_20 = arith.constant 0 : index
    %c0_21 = arith.constant 0 : index
    %c0_22 = arith.constant 0 : index
    %35 = vector.load %arg6[%c0_19, %c0_20, %c0_21, %c0_22] : memref<1x3x2x128xf32, #tpu.memory_space<vmem>>, vector<1x1x2x128xf32>
    %36 = vector.shape_cast %35 : vector<1x1x2x128xf32> to vector<2x128xf32>
    %37 = vector.shape_cast %34 : vector<2x128xf32> to vector<1x1x2x128xf32>
    tpu.vector_store %arg6[%c0_19, %c0_20, %c0_21, %c0_22], %37 {strides = array<i32>} : memref<1x3x2x128xf32, #tpu.memory_space<vmem>>, vector<1x1x2x128xf32>,
    %c1_23 = arith.constant 1 : index
    %c0_24 = arith.constant 0 : index
    %38 = memref.load %arg3[%c1_23, %c0_24] : memref<3x3xf32, #tpu.memory_space<smem>>
    %39 = vector.broadcast %38 : f32 to vector<2x128xf32>
    %40 = arith.mulf %6, %39 : vector<2x128xf32>
    %c1_25 = arith.constant 1 : index
    %c1_26 = arith.constant 1 : index
    %41 = memref.load %arg3[%c1_25, %c1_26] : memref<3x3xf32, #tpu.memory_space<smem>>
    %42 = vector.broadcast %41 : f32 to vector<2x128xf32>
    %43 = arith.mulf %13, %42 : vector<2x128xf32>
    %44 = arith.addf %40, %43 : vector<2x128xf32>
    %c1_27 = arith.constant 1 : index
    %c2_28 = arith.constant 2 : index
    %45 = memref.load %arg3[%c1_27, %c2_28] : memref<3x3xf32, #tpu.memory_space<smem>>
    %46 = vector.broadcast %45 : f32 to vector<2x128xf32>
    %47 = arith.mulf %20, %46 : vector<2x128xf32>
    %48 = arith.addf %44, %47 : vector<2x128xf32>
    %c1_29 = arith.constant 1 : index
    %49 = memref.load %arg5[%c1_29] : memref<3xf32, #tpu.memory_space<smem>>
    %50 = vector.broadcast %49 : f32 to vector<2x128xf32>
    %51 = arith.addf %48, %50 : vector<2x128xf32>
    %c0_30 = arith.constant 0 : index
    %c1_31 = arith.constant 1 : index
    %c0_32 = arith.constant 0 : index
    %c0_33 = arith.constant 0 : index
    %52 = vector.load %arg6[%c0_30, %c1_31, %c0_32, %c0_33] : memref<1x3x2x128xf32, #tpu.memory_space<vmem>>, vector<1x1x2x128xf32>
    %53 = vector.shape_cast %52 : vector<1x1x2x128xf32> to vector<2x128xf32>
    %54 = vector.shape_cast %51 : vector<2x128xf32> to vector<1x1x2x128xf32>
    tpu.vector_store %arg6[%c0_30, %c1_31, %c0_32, %c0_33], %54 {strides = array<i32>} : memref<1x3x2x128xf32, #tpu.memory_space<vmem>>, vector<1x1x2x128xf32>,
    %c2_34 = arith.constant 2 : index
    %c0_35 = arith.constant 0 : index
    %55 = memref.load %arg3[%c2_34, %c0_35] : memref<3x3xf32, #tpu.memory_space<smem>>
    %56 = vector.broadcast %55 : f32 to vector<2x128xf32>
    %57 = arith.mulf %6, %56 : vector<2x128xf32>
    %c2_36 = arith.constant 2 : index
    %c1_37 = arith.constant 1 : index
    %58 = memref.load %arg3[%c2_36, %c1_37] : memref<3x3xf32, #tpu.memory_space<smem>>
    %59 = vector.broadcast %58 : f32 to vector<2x128xf32>
    %60 = arith.mulf %13, %59 : vector<2x128xf32>
    %61 = arith.addf %57, %60 : vector<2x128xf32>
    %c2_38 = arith.constant 2 : index
    %c2_39 = arith.constant 2 : index
    %62 = memref.load %arg3[%c2_38, %c2_39] : memref<3x3xf32, #tpu.memory_space<smem>>
    %63 = vector.broadcast %62 : f32 to vector<2x128xf32>
    %64 = arith.mulf %20, %63 : vector<2x128xf32>
    %65 = arith.addf %61, %64 : vector<2x128xf32>
    %c2_40 = arith.constant 2 : index
    %66 = memref.load %arg5[%c2_40] : memref<3xf32, #tpu.memory_space<smem>>
    %67 = vector.broadcast %66 : f32 to vector<2x128xf32>
    %68 = arith.addf %65, %67 : vector<2x128xf32>
    %c0_41 = arith.constant 0 : index
    %c2_42 = arith.constant 2 : index
    %c0_43 = arith.constant 0 : index
    %c0_44 = arith.constant 0 : index
    %69 = vector.load %arg6[%c0_41, %c2_42, %c0_43, %c0_44] : memref<1x3x2x128xf32, #tpu.memory_space<vmem>>, vector<1x1x2x128xf32>
    %70 = vector.shape_cast %69 : vector<1x1x2x128xf32> to vector<2x128xf32>
    %71 = vector.shape_cast %68 : vector<2x128xf32> to vector<1x1x2x128xf32>
    tpu.vector_store %arg6[%c0_41, %c2_42, %c0_43, %c0_44], %71 {strides = array<i32>} : memref<1x3x2x128xf32, #tpu.memory_space<vmem>>, vector<1x1x2x128xf32>,
    return
  }
  func.func @transform_0(%arg0: i32, %arg1: i32) -> (i32, i32, i32, i32) {
    %c0_i32 = arith.constant 0 : i32
    %c0_i32_0 = arith.constant 0 : i32
    %c0_i32_1 = arith.constant 0 : i32
    return %arg0, %c0_i32, %arg1, %c0_i32_0 : i32, i32, i32, i32
  }
  func.func @transform_1(%arg0: i32, %arg1: i32) -> (i32, i32) {
    %c0_i32 = arith.constant 0 : i32
    %c0_i32_0 = arith.constant 0 : i32
    %c0_i32_1 = arith.constant 0 : i32
    return %c0_i32, %c0_i32_0 : i32, i32
  }
  func.func @transform_2(%arg0: i32, %arg1: i32) -> i32 {
    %c0_i32 = arith.constant 0 : i32
    %c0_i32_0 = arith.constant 0 : i32
    return %c0_i32 : i32
  }
  func.func @transform_3(%arg0: i32, %arg1: i32) -> i32 {
    %c0_i32 = arith.constant 0 : i32
    %c0_i32_0 = arith.constant 0 : i32
    return %c0_i32 : i32
  }
  func.func @transform_4(%arg0: i32, %arg1: i32) -> (i32, i32, i32, i32) {
    %c0_i32 = arith.constant 0 : i32
    %c0_i32_0 = arith.constant 0 : i32
    %c0_i32_1 = arith.constant 0 : i32
    return %arg0, %c0_i32, %arg1, %c0_i32_0 : i32, i32, i32, i32
  }
}

</mosaic_0001>

<llo_original>
// kernel: tpu_custom_call.1
$region0: #{tpu_custom_call.1}
  #allocation0 [shape = 'u32[]', space=smem, size = 0x4, offset = 0x4, fixed_abs, tag = 'smem constant byte address 0x4 - core index']
  #allocation1 [shape = 'u32[144,128]{1,0:T(1,128)}', space=vmem, size = 0x12000, scoped, tag = 'internal scratch']
  %s0 = inlined_call_operand.hbm [shape: f32[2,3,2,128], index: 0, kind: input, shape index: {}]
  %s1 = inlined_call_operand.hbm [shape: f32[3,3], index: 1, kind: input, shape index: {}]
  %s2 = inlined_call_operand.vmem [shape: f32[3], index: 2, kind: input, shape index: {}]
  %s3 = inlined_call_operand.vmem [shape: f32[3], index: 3, kind: input, shape index: {}]
  %s4 = inlined_call_operand.hbm [shape: f32[2,3,2,128], index: 4, kind: output, shape index: {}]
  %s5 = sld [smem:[#allocation0]]
  $region65: #{tpu_custom_call.1} parent=0
    _
  %s7 = ssub.s32 1, %s5
  %s8 = scalar_select 0, %s7, %s5
  $region1: #{tpu_custom_call.1} parent=0
    #allocation2 [shape = 'u8[6144]{0}', space=vmem, size = 0x1800, scoped, tag = 'input window, operand 0']
    #allocation3 [shape = 's32[2]{0}', space=sflag, size = 0x8, scoped, tag = 'scoped memory for tpu_custom_call.1']
    #allocation4 [shape = 's32[2]{0}', space=sflag, size = 0x8, scoped, tag = 'scoped memory for tpu_custom_call.1']
    #allocation5 [shape = 's32[2]{0}', space=sflag, size = 0x8, scoped, tag = 'scoped memory for tpu_custom_call.1']
    #allocation6 [shape = 's32[2]{0}', space=sflag, size = 0x8, scoped, tag = 'scoped memory for tpu_custom_call.1']
    #allocation7 [shape = 'u8[2048]{0}', space=smem, size = 0x800, scoped, tag = 'input window, operand 1, single buffered']
    #allocation8 [shape = 'u8[512]{0}', space=smem, size = 0x200, scoped, tag = 'input window, operand 2, single buffered']
    #allocation9 [shape = 'u8[512]{0}', space=smem, size = 0x200, scoped, tag = 'input window, operand 3, single buffered']
    #allocation10 [shape = 's32[1]{0}', space=sflag, size = 0x4, scoped, tag = 'scoped memory for tpu_custom_call.1']
    #allocation11 [shape = 'u8[6144]{0}', space=vmem, size = 0x1800, scoped, tag = 'output window, operand 0']
    %9 = vsyncpa [#allocation3], 0
    %s10 = scalar_lea.sflag [#allocation3], 1
    %11 = vsyncpa %s10, 0
    %12 = vsyncpa [#allocation5], 0
    %13 = vsyncpa [#allocation6], 0
    %14 = vsyncpa [#allocation10], 0
    %15 = vsyncpa [#allocation4], 0
    %s16 = scalar_lea.sflag [#allocation4], 1
    %17 = vsyncpa %s16, 0
    loop: start=0, step=1, limit=4
    $region2: #{tpu_custom_call.1} parent=1 // loop_pre_header
      _
    $region3: #{tpu_custom_call.1} parent=1 // loop_header
      %s19 = sphi 0, %s23
      %p20 = scmp.ge.s32.totalorder %s19, 4
      %s26 = sphi 0, %s38
      %s27 = sphi 0, %s34
      %s28 = sphi 0, %s26
      %s29 = sphi 0, %s27
      %s30 = sphi 0, %s28
      %s31 = sphi 0, %s29
      %s43 = sphi 0, %s45
      %s46 = sphi 0, %s43
      %s47 = sphi 0, %s46
      %s63 = sphi 0, %s47
      %s67 = sphi 0, %s67
      %s69 = sphi 0, %s67
      %s70 = sphi 0, %s69
      %s84 = sphi 0, %s70
      %s88 = sphi 0, %s88
      %s90 = sphi 0, %s88
      %s91 = sphi 0, %s90
      %s105 = sphi 0, %s91
      %s109 = sphi 0, %s109
      %s111 = sphi 0, %s109
      %s112 = sphi 0, %s111
      %s126 = sphi 0, %s112
      %s134 = sphi 0, %s136
      %s137 = sphi 0, %s134
      %s138 = sphi 0, %s137
      %s154 = sphi 0, %s138
    $region4: #{tpu_custom_call.1} parent=1 // loop_header_branch
      %22 = sbr.rel (%p20) target = $region8
    $region5: #{tpu_custom_call.1} parent=1 // loop_body
      %s24 = ssub.s32 %s19, 1
      %s25 = ssub.s32 %s19, 2
      %s32 = sadd.s32 1, %s27
      %p33 = scmp.ge.s32.totalorder %s32, 1
      %s34 = scalar_select %p33, 0, %s32
      %s35 = sadd.s32 1, %s26
      %s36 = scalar_select %p33, %s35, %s26
      %p37 = scmp.ge.s32.totalorder %s36, 2
      %s38 = scalar_select %p37, 0, %s36
      %s39 = ssub.s32 %s26, %s38
      %s40 = ssub.s32 %s27, %s34
      %s41 = sor.u32 %s39, %s40
      %p42 = scmp.eq.s32.totalorder %s41, 0
      %s44 = sadd.s32 %s43, 1
      %s45 = scalar_select %p42, %s43, %s44
      %p48 = pneg %p42
      %p49 = scmp.eq.s32.totalorder %s19, 1
      %p50 = por %p48, %p49
      %p51 = scmp.ne.s32.totalorder %s43, %s46
      %p52 = scmp.eq.s32.totalorder %s19, 0
      %p53 = por %p51, %p52
      %p54 = scmp.ne.s32.totalorder %s43, %s46
      %p55 = scmp.eq.s32.totalorder %s24, 1
      %p56 = por %p54, %p55
      %p57 = scmp.ne.s32.totalorder %s46, %s47
      %p58 = scmp.eq.s32.totalorder %s24, 0
      %p59 = por %p57, %p58
      %p60 = scmp.ne.s32.totalorder %s46, %s47
      %p61 = scmp.eq.s32.totalorder %s25, 1
      %p62 = por %p60, %p61
      %p64 = scmp.ne.s32.totalorder %s47, %s63
      %p65 = scmp.eq.s32.totalorder %s25, 0
      %p66 = por %p64, %p65
      %s68 = sadd.s32 %s67, 1
      %p71 = scmp.eq.s32.totalorder %s19, 1
      %p72 = scmp.ne.s32.totalorder %s67, %s69
      %p73 = scmp.eq.s32.totalorder %s19, 0
      %p74 = por %p72, %p73
      %p75 = scmp.ne.s32.totalorder %s67, %s69
      %p76 = scmp.eq.s32.totalorder %s24, 1
      %p77 = por %p75, %p76
      %p78 = scmp.ne.s32.totalorder %s69, %s70
      %p79 = scmp.eq.s32.totalorder %s24, 0
      %p80 = por %p78, %p79
      %p81 = scmp.ne.s32.totalorder %s69, %s70
      %p82 = scmp.eq.s32.totalorder %s25, 1
      %p83 = por %p81, %p82
      %p85 = scmp.ne.s32.totalorder %s70, %s84
      %p86 = scmp.eq.s32.totalorder %s25, 0
      %p87 = por %p85, %p86
      %s89 = sadd.s32 %s88, 1
      %p92 = scmp.eq.s32.totalorder %s19, 1
      %p93 = scmp.ne.s32.totalorder %s88, %s90
      %p94 = scmp.eq.s32.totalorder %s19, 0
      %p95 = por %p93, %p94
      %p96 = scmp.ne.s32.totalorder %s88, %s90
      %p97 = scmp.eq.s32.totalorder %s24, 1
      %p98 = por %p96, %p97
      %p99 = scmp.ne.s32.totalorder %s90, %s91
      %p100 = scmp.eq.s32.totalorder %s24, 0
      %p101 = por %p99, %p100
      %p102 = scmp.ne.s32.totalorder %s90, %s91
      %p103 = scmp.eq.s32.totalorder %s25, 1
      %p104 = por %p102, %p103
      %p106 = scmp.ne.s32.totalorder %s91, %s105
      %p107 = scmp.eq.s32.totalorder %s25, 0
      %p108 = por %p106, %p107
      %s110 = sadd.s32 %s109, 1
      %p113 = scmp.eq.s32.totalorder %s19, 1
      %p114 = scmp.ne.s32.totalorder %s109, %s111
      %p115 = scmp.eq.s32.totalorder %s19, 0
      %p116 = por %p114, %p115
      %p117 = scmp.ne.s32.totalorder %s109, %s111
      %p118 = scmp.eq.s32.totalorder %s24, 1
      %p119 = por %p117, %p118
      %p120 = scmp.ne.s32.totalorder %s111, %s112
      %p121 = scmp.eq.s32.totalorder %s24, 0
      %p122 = por %p120, %p121
      %p123 = scmp.ne.s32.totalorder %s111, %s112
      %p124 = scmp.eq.s32.totalorder %s25, 1
      %p125 = por %p123, %p124
      %p127 = scmp.ne.s32.totalorder %s112, %s126
      %p128 = scmp.eq.s32.totalorder %s25, 0
      %p129 = por %p127, %p128
      %s130 = ssub.s32 %s26, %s38
      %s131 = ssub.s32 %s27, %s34
      %s132 = sor.u32 %s130, %s131
      %p133 = scmp.eq.s32.totalorder %s132, 0
      %s135 = sadd.s32 %s134, 1
      %s136 = scalar_select %p133, %s134, %s135
      %p139 = pneg %p133
      %p140 = scmp.eq.s32.totalorder %s19, 1
      %p141 = por %p139, %p140
      %p142 = scmp.ne.s32.totalorder %s134, %s137
      %p143 = scmp.eq.s32.totalorder %s19, 0
      %p144 = por %p142, %p143
      %p145 = scmp.ne.s32.totalorder %s134, %s137
      %p146 = scmp.eq.s32.totalorder %s24, 1
      %p147 = por %p145, %p146
      %p148 = scmp.ne.s32.totalorder %s137, %s138
      %p149 = scmp.eq.s32.totalorder %s24, 0
      %p150 = por %p148, %p149
      %p151 = scmp.ne.s32.totalorder %s137, %s138
      %p152 = scmp.eq.s32.totalorder %s25, 1
      %p153 = por %p151, %p152
      %p155 = scmp.ne.s32.totalorder %s138, %s154
      %p156 = scmp.eq.s32.totalorder %s25, 0
      %p157 = por %p155, %p156
      %p158 = scmp.le.s32.totalorder 1, %s19
      %p159 = scmp.lt.s32.totalorder %s19, 3
      %p160 = pnand %p158, %p159
      %p161 = pneg %p160
      // Predicated region
      $region9: #{tpu_custom_call.1} parent=5 // pred_check
        _
      $region10: #{tpu_custom_call.1} parent=5 // pred_check_branch
        %163 = sbr.rel (%p160) target = $region12
      $region11: #{tpu_custom_call.1} parent=5 // pred_region
        %s164 = ssub.s32 %s19, 1
        // Predicated region
        $region13: #{tpu_custom_call.1} parent=11 // pred_check
          %p165 = pneg %p80
        $region14: #{tpu_custom_call.1} parent=11 // pred_check_branch
          %167 = sbr.rel (%p165) target = $region16
        $region15: #{tpu_custom_call.1} parent=11 // pred_region
          %s169 = ssub.s32 64, 64
          %170 = vsyncadd [#allocation5], %s169
          %173 = dma.hbm_to_smem %s1, 64, [#allocation7], [#allocation5]
        $region16: #{tpu_custom_call.1} parent=11 // pred_fallthru
          _
        // Predicated region
        $region17: #{tpu_custom_call.1} parent=11 // pred_check
          %p174 = pneg %p101
        $region18: #{tpu_custom_call.1} parent=11 // pred_check_branch
          %176 = sbr.rel (%p174) target = $region20
        $region19: #{tpu_custom_call.1} parent=11 // pred_region
          %s178 = ssub.s32 16, 16
          %179 = vsyncadd [#allocation6], %s178
          %s181 = sshll.u32 %s2, 4
          %s182 = int_to_ptr.vmem [resolvable:$true] %s181
          %184 = dma.vmem_to_smem %s182, 16, [#allocation8], [#allocation6]
        $region20: #{tpu_custom_call.1} parent=11 // pred_fallthru
          _
        // Predicated region
        $region21: #{tpu_custom_call.1} parent=11 // pred_check
          %p185 = pneg %p122
        $region22: #{tpu_custom_call.1} parent=11 // pred_check_branch
          %187 = sbr.rel (%p185) target = $region24
        $region23: #{tpu_custom_call.1} parent=11 // pred_region
          %s189 = ssub.s32 16, 16
          %190 = vsyncadd [#allocation10], %s189
          %s192 = sshll.u32 %s3, 4
          %s193 = int_to_ptr.vmem [resolvable:$true] %s192
          %195 = dma.vmem_to_smem %s193, 16, [#allocation9], [#allocation10]
        $region24: #{tpu_custom_call.1} parent=11 // pred_fallthru
          _
      $region12: #{tpu_custom_call.1} parent=5 // pred_fallthru
        _
      %p196 = scmp.lt.s32.totalorder %s19, 2
      // Predicated region
      $region25: #{tpu_custom_call.1} parent=5 // pred_check
        %p197 = pneg %p196
      $region26: #{tpu_custom_call.1} parent=5 // pred_check_branch
        %199 = sbr.rel (%p197) target = $region28
      $region27: #{tpu_custom_call.1} parent=5 // pred_region
        // Predicated region
        $region29: #{tpu_custom_call.1} parent=27 // pred_check
          %p200 = pneg %p53
        $region30: #{tpu_custom_call.1} parent=27 // pred_check_branch
          %202 = sbr.rel (%p200) target = $region32
        $region31: #{tpu_custom_call.1} parent=27 // pred_region
          %s203 = sand.u32 %s43, 1
          %s204 = scalar_lea.sflag [#allocation3], %s203
          %s205 = sand.u32 %s43, 1
          %s206 = smul.addr %s205, 6
          %s207 = scalar_lea.vmem [#allocation2], %s206
          %s209 = ssub.s32 96, 96
          %210 = vsyncadd %s204, %s209
          %s211 = smul.addr %s26, 3
          %s212 = sadd.s32 %s27, %s211
          %s213 = smul.addr %s212, 32
          %s214 = scalar_lea.hbm %s0, %s213
          %s215 = sshll.u32 %s207, 4
          %s216 = int_to_ptr.vmem [resolvable:$true] %s215
          %221 = dma.hbm_to_vmem [thread:$0]  %s214, 96, %s216, %s204, 32, 32, 2
        $region32: #{tpu_custom_call.1} parent=27 // pred_fallthru
          _
      $region28: #{tpu_custom_call.1} parent=5 // pred_fallthru
        _
      %p222 = scmp.le.s32.totalorder 1, %s19
      %p223 = scmp.lt.s32.totalorder %s19, 3
      %p224 = pnand %p222, %p223
      %p225 = pneg %p224
      // Predicated region
      $region33: #{tpu_custom_call.1} parent=5 // pred_check
        _
      $region34: #{tpu_custom_call.1} parent=5 // pred_check_branch
        %227 = sbr.rel (%p224) target = $region36
      $region35: #{tpu_custom_call.1} parent=5 // pred_region
        %s228 = ssub.s32 %s19, 1
        %s229 = sand.u32 %s46, 1
        %s230 = scalar_lea.sflag [#allocation3], %s229
        %s231 = sand.u32 %s46, 1
        %s232 = smul.addr %s231, 6
        %s233 = scalar_lea.vmem [#allocation2], %s232
        // Predicated region
        $region37: #{tpu_custom_call.1} parent=35 // pred_check
          %p234 = pneg %p59
        $region38: #{tpu_custom_call.1} parent=35 // pred_check_branch
          %236 = sbr.rel (%p234) target = $region40
        $region39: #{tpu_custom_call.1} parent=35 // pred_region
          %237 = dma.done %s230, 96
        $region40: #{tpu_custom_call.1} parent=35 // pred_fallthru
          _
        // Predicated region
        $region41: #{tpu_custom_call.1} parent=35 // pred_check
          %p238 = pneg %p80
        $region42: #{tpu_custom_call.1} parent=35 // pred_check_branch
          %240 = sbr.rel (%p238) target = $region44
        $region43: #{tpu_custom_call.1} parent=35 // pred_region
          %241 = dma.done [#allocation5], 64
        $region44: #{tpu_custom_call.1} parent=35 // pred_fallthru
          _
        // Predicated region
        $region45: #{tpu_custom_call.1} parent=35 // pred_check
          %p242 = pneg %p101
        $region46: #{tpu_custom_call.1} parent=35 // pred_check_branch
          %244 = sbr.rel (%p242) target = $region48
        $region47: #{tpu_custom_call.1} parent=35 // pred_region
          %245 = dma.done [#allocation6], 16
        $region48: #{tpu_custom_call.1} parent=35 // pred_fallthru
          _
        // Predicated region
        $region49: #{tpu_custom_call.1} parent=35 // pred_check
          %p246 = pneg %p122
        $region50: #{tpu_custom_call.1} parent=35 // pred_check_branch
          %248 = sbr.rel (%p246) target = $region52
        $region51: #{tpu_custom_call.1} parent=35 // pred_region
          %249 = dma.done [#allocation10], 16
        $region52: #{tpu_custom_call.1} parent=35 // pred_fallthru
          _
        %250 = sfence
        %s251 = sand.u32 %s46, 1
        %s252 = scalar_lea.sflag [#allocation3], %s251
        %s253 = sand.u32 %s46, 1
        %s254 = smul.addr %s253, 6
        %s255 = scalar_lea.vmem [#allocation2], %s254
        %p256 = pneg %p59
        %p257 = pneg %p56
        %p258 = pneg %p80
        %p259 = pneg %p77
        %p260 = pneg %p101
        %p261 = pneg %p98
        %p262 = pneg %p122
        %p263 = pneg %p119
        %p264 = pneg %p150
        %p265 = pneg %p147
        %s266 = sand.u32 %s137, 1
        %s267 = scalar_lea.sflag [#allocation4], %s266
        %s268 = sand.u32 %s137, 1
        %s269 = smul.addr %s268, 6
        %s270 = scalar_lea.vmem [#allocation11], %s269
        %v271 = vld [vmem:[%s233] sm:$0x3]
        %v272 = vmul.f32 %v271, %v271
        %s273 = sld [smem:[#allocation8]]
        %v274 = vstv %s273
        %v275 = vadd.f32 %v272, %v274
        %v276 = vmul.f32 %v272, %v275
        %s277 = scalar_lea.vmem %s233, 2 [#allocation2]
        %v278 = vld [vmem:[%s277] sm:$0x3]
        %v279 = vmul.f32 %v278, %v278
        %s280 = sld [smem:[#allocation8 + $0x1]]
        %v281 = vstv %s280
        %v282 = vadd.f32 %v279, %v281
        %v283 = vmul.f32 %v279, %v282
        %s284 = scalar_lea.vmem %s233, 4 [#allocation2]
        %v285 = vld [vmem:[%s284] sm:$0x3]
        %v286 = vmul.f32 %v285, %v285
        %s287 = sld [smem:[#allocation8 + $0x2]]
        %v288 = vstv %s287
        %v289 = vadd.f32 %v286, %v288
        %v290 = vmul.f32 %v286, %v289
        %s291 = sld [smem:[#allocation7]]
        %v292 = vstv %s291
        %v293 = vmul.f32 %v276, %v292
        %s294 = sld [smem:[#allocation7 + $0x1]]
        %v295 = vstv %s294
        %v296 = vmul.f32 %v283, %v295
        %v297 = vadd.f32 %v293, %v296
        %s298 = sld [smem:[#allocation7 + $0x2]]
        %v299 = vstv %s298
        %v300 = vmul.f32 %v290, %v299
        %v301 = vadd.f32 %v297, %v300
        %s302 = sld [smem:[#allocation9]]
        %v303 = vstv %s302
        %v304 = vadd.f32 %v301, %v303
        %305 = vst [vmem:[%s270] sm:$0x3] %v304
        %s306 = sld [smem:[#allocation7 + $0x80]]
        %v307 = vstv %s306
        %v308 = vmul.f32 %v276, %v307
        %s309 = sld [smem:[#allocation7 + $0x81]]
        %v310 = vstv %s309
        %v311 = vmul.f32 %v283, %v310
        %v312 = vadd.f32 %v308, %v311
        %s313 = sld [smem:[#allocation7 + $0x82]]
        %v314 = vstv %s313
        %v315 = vmul.f32 %v290, %v314
        %v316 = vadd.f32 %v312, %v315
        %s317 = sld [smem:[#allocation9 + $0x1]]
        %v318 = vstv %s317
        %v319 = vadd.f32 %v316, %v318
        %s320 = scalar_lea.vmem %s270, 2 [#allocation11]
        %321 = vst [vmem:[%s320] sm:$0x3] %v319
        %s322 = sld [smem:[#allocation7 + $0x100]]
        %v323 = vstv %s322
        %v324 = vmul.f32 %v276, %v323
        %s325 = sld [smem:[#allocation7 + $0x101]]
        %v326 = vstv %s325
        %v327 = vmul.f32 %v283, %v326
        %v328 = vadd.f32 %v324, %v327
        %s329 = sld [smem:[#allocation7 + $0x102]]
        %v330 = vstv %s329
        %v331 = vmul.f32 %v290, %v330
        %v332 = vadd.f32 %v328, %v331
        %s333 = sld [smem:[#allocation9 + $0x2]]
        %v334 = vstv %s333
        %v335 = vadd.f32 %v332, %v334
        %s336 = scalar_lea.vmem %s270, 4 [#allocation11]
        %337 = vst [vmem:[%s336] sm:$0x3] %v335
        %s338 = sand.u32 %s137, 1
        %s339 = scalar_lea.sflag [#allocation4], %s338
        %s340 = sand.u32 %s137, 1
        %s341 = smul.addr %s340, 6
        %s342 = scalar_lea.vmem [#allocation11], %s341
        // Predicated region
        $region53: #{tpu_custom_call.1} parent=35 // pred_check
          %p343 = pneg %p147
        $region54: #{tpu_custom_call.1} parent=35 // pred_check_branch
          %345 = sbr.rel (%p343) target = $region56
        $region55: #{tpu_custom_call.1} parent=35 // pred_region
          %s347 = ssub.s32 96, 96
          %348 = vsyncadd %s339, %s347
          %s349 = smul.addr %s28, 3
          %s350 = sadd.s32 %s29, %s349
          %s351 = smul.addr %s350, 32
          %s352 = scalar_lea.hbm %s4, %s351
          %s353 = sshll.u32 %s342, 4
          %s354 = int_to_ptr.vmem [resolvable:$true] %s353
          %359 = dma.vmem_to_hbm [thread:$0]  %s354, 96, %s352, %s339, 32, 32, 2
        $region56: #{tpu_custom_call.1} parent=35 // pred_fallthru
          _
      $region36: #{tpu_custom_call.1} parent=5 // pred_fallthru
        _
      %p360 = scmp.le.s32.totalorder 2, %s19
      // Predicated region
      $region57: #{tpu_custom_call.1} parent=5 // pred_check
        %p361 = pneg %p360
      $region58: #{tpu_custom_call.1} parent=5 // pred_check_branch
        %363 = sbr.rel (%p361) target = $region60
      $region59: #{tpu_custom_call.1} parent=5 // pred_region
        %s364 = ssub.s32 %s19, 2
        // Predicated region
        $region61: #{tpu_custom_call.1} parent=59 // pred_check
          %p365 = pneg %p153
        $region62: #{tpu_custom_call.1} parent=59 // pred_check_branch
          %367 = sbr.rel (%p365) target = $region64
        $region63: #{tpu_custom_call.1} parent=59 // pred_region
          %s368 = sand.u32 %s138, 1
          %s369 = scalar_lea.sflag [#allocation4], %s368
          %s370 = sand.u32 %s138, 1
          %s371 = smul.addr %s370, 6
          %s372 = scalar_lea.vmem [#allocation11], %s371
          %373 = dma.done %s369, 96
        $region64: #{tpu_custom_call.1} parent=59 // pred_fallthru
          _
      $region60: #{tpu_custom_call.1} parent=5 // pred_fallthru
        _
    $region6: #{tpu_custom_call.1} parent=1 // loop_footer
      %s23 = sadd.s32 1, %s19
    $region7: #{tpu_custom_call.1} parent=1 // loop_footer_branch
      %18 = sbr.rel target = $region3
    $region8: #{tpu_custom_call.1} parent=1 // loop_exit
      _
    %374 = vsyncpa [#allocation3], 1
    %s375 = scalar_lea.sflag [#allocation3], 1
    %376 = vsyncpa %s375, 1
    %377 = vsyncpa [#allocation4], 1
    %s378 = scalar_lea.sflag [#allocation4], 1
    %379 = vsyncpa %s378, 1
    %380 = vsyncpa [#allocation5], 1
    %s381 = scalar_lea.sflag [#allocation5], 1
    %382 = vsyncpa %s381, 1
    %383 = vsyncpa [#allocation6], 1
    %s384 = scalar_lea.sflag [#allocation6], 1
    %385 = vsyncpa %s384, 1
    %386 = vsyncpa [#allocation10], 1

</llo_original>
